<compile_context>
chip_gen: v6e
topology: v6e:2x2x1
jax: 0.10.0
libtpu: 0.0.40
codegen_flags: <defaults>
</compile_context>

<pallas_src>
import functools

import jax
import jax.numpy as jnp
from jax import lax
from jax.experimental import pallas as pl
from jax.experimental.pallas import tpu as pltpu

BN_EPS = 1e-5
# ~512-row tiles: fits v7x's 64 MiB with double buffering; v5e/v6e could use 1024.
DEFAULT_TILE_ROWS = 512


def _round_up(x, m):
    return (x + m - 1) // m * m


def _vmem_limit_bytes(tile, d, h, has_add):
    """Scoped-VMEM limit derived from the per-step footprint (f32 words)."""
    streamed = tile * (d * (2 if has_add else 1) + h)   # x (+add) tile + out tile
    resident = d * h + 3 * d + 2 * h                    # w, gamma/beta/scale, b/bias
    words = 2 * (streamed + resident) + 2 * d           # 2x double-buffering + scratch
    need = 4 * words * 2 + (2 << 20)                    # bytes, 2x headroom + 2 MiB
    return int(min(max(need, 16 << 20), 64 << 20))      # valid on v5e/v6e/v7x


# ---------------------------------------------------------------------------
# Pass 1: per-column stats over row tiles  ->  folded (scale, bias)
# ---------------------------------------------------------------------------
def _bn_fold_stats_kernel(*refs, inv_n, has_add):
    if has_add:
        (x_ref, add_ref, gamma_ref, beta_ref, w_ref, b_ref,
         scale_ref, bias_ref, sum_ref, sumsq_ref) = refs
    else:
        (x_ref, gamma_ref, beta_ref, w_ref, b_ref,
         scale_ref, bias_ref, sum_ref, sumsq_ref) = refs
        add_ref = None

    i = pl.program_id(0)

    @pl.when(i == 0)
    def _init():
        sum_ref[...] = jnp.zeros_like(sum_ref)
        sumsq_ref[...] = jnp.zeros_like(sumsq_ref)

    x = x_ref[...].astype(jnp.float32)
    if add_ref is not None:                      # fused "tag_feat += tag_embed(ids)"
        x = x + add_ref[...].astype(jnp.float32)
    sum_ref[...] += jnp.sum(x, axis=0, keepdims=True)
    sumsq_ref[...] += jnp.sum(x * x, axis=0, keepdims=True)

    @pl.when(i == pl.num_programs(0) - 1)
    def _finalize():
        inv = jnp.float32(inv_n)                 # divide by the TRUE row count
        mean = sum_ref[...] * inv
        # Clamp: one-pass variance can go slightly negative (cancellation).
        var = jnp.maximum(sumsq_ref[...] * inv - mean * mean, 0.0)
        s = gamma_ref[...] * lax.rsqrt(var + jnp.float32(BN_EPS))
        scale_ref[...] = s
        # Folded bias: (beta - mean*s) @ W + b.  Tiny (1,D)@(D,H) matmul that
        # now runs ONCE per call (not once per row tile).
        bias_ref[...] = jnp.dot(beta_ref[...] - mean * s, w_ref[...],
                                preferred_element_type=jnp.float32) + b_ref[...]


# ---------------------------------------------------------------------------
# Pass 2: folded normalize + matmul, one MXU pass per row tile
# ---------------------------------------------------------------------------
def _bn_fold_apply_kernel(*refs, has_add):
    if has_add:
        x_ref, add_ref, scale_ref, bias_ref, w_ref, out_ref = refs
    else:
        x_ref, scale_ref, bias_ref, w_ref, out_ref = refs
        add_ref = None

    x = x_ref[...].astype(jnp.float32)
    if add_ref is not None:
        x = x + add_ref[...].astype(jnp.float32)
    out_ref[...] = (jnp.dot(x * scale_ref[...], w_ref[...],
                            preferred_element_type=jnp.float32)
                    + bias_ref[...]).astype(out_ref.dtype)


# ---------------------------------------------------------------------------
# Wrapper: BatchNorm1d (batch stats) + Linear, row-tiled two-pass pipeline
# ---------------------------------------------------------------------------
def bn_linear_forward(x, gamma, beta, w, b, add=None, *,
                      tile_rows=DEFAULT_TILE_ROWS):
    n, d = x.shape
    h = w.shape[1]
    has_add = add is not None

    tile = n if n <= tile_rows else tile_rows     # tile == N or a multiple of 8
    n_pad = _round_up(n, tile)
    if n_pad != n:
        # Zero rows do not perturb sum / sumsq; stats still divide by true n.
        pad = ((0, n_pad - n), (0, 0))
        x = jnp.pad(x, pad)
        if has_add:
            add = jnp.pad(add, pad)
    n_tiles = n_pad // tile
    inv_n = 1.0 / n

    stream_spec = pl.BlockSpec((tile, d), lambda i: (i, 0))   # streamed row tiles
    row_d_spec = pl.BlockSpec((1, d), lambda i: (0, 0))       # resident
    row_h_spec = pl.BlockSpec((1, h), lambda i: (0, 0))       # resident
    w_spec = pl.BlockSpec((d, h), lambda i: (0, 0))           # resident

    vmem_limit = _vmem_limit_bytes(tile, d, h, has_add)

    stream_in = [x, add] if has_add else [x]
    stream_specs = [stream_spec] * len(stream_in)

    # Pass 1: stats + BN->Linear fold ('arbitrary' reduction over row tiles).
    scale, bias = pl.pallas_call(
        functools.partial(_bn_fold_stats_kernel, inv_n=inv_n, has_add=has_add),
        grid=(n_tiles,),
        in_specs=stream_specs + [row_d_spec, row_d_spec, w_spec, row_h_spec],
        out_specs=(row_d_spec, row_h_spec),
        out_shape=(jax.ShapeDtypeStruct((1, d), jnp.float32),
                   jax.ShapeDtypeStruct((1, h), jnp.float32)),
        scratch_shapes=[pltpu.VMEM((1, d), jnp.float32),    # col sum
                        pltpu.VMEM((1, d), jnp.float32)],   # col sum of squares
        compiler_params=pltpu.CompilerParams(
            dimension_semantics=("arbitrary",),
            vmem_limit_bytes=vmem_limit),
    )(*stream_in, gamma, beta, w, b)

    # Pass 2: apply ('parallel' row tiles -> sharded across v7x's 2 TensorCores).
    out = pl.pallas_call(
        functools.partial(_bn_fold_apply_kernel, has_add=has_add),
        grid=(n_tiles,),
        in_specs=stream_specs + [row_d_spec, row_h_spec, w_spec],
        out_specs=pl.BlockSpec((tile, h), lambda i: (i, 0)),
        out_shape=jax.ShapeDtypeStruct((n_pad, h), jnp.float32),
        compiler_params=pltpu.CompilerParams(
            dimension_semantics=("parallel",),
            vmem_limit_bytes=vmem_limit),
    )(*stream_in, scale, bias, w)

    return out[:n] if n_pad != n else out


def common_embedding_forward(params, video_feat, tag_feat, tag_ids, *,
                             tile_rows=DEFAULT_TILE_ROWS):
    """CommonEmbedding.forward on the node features carried by mfgs[0].

    video_feat: [N_video, video_in_dim] f32
    tag_feat  : [N_tag,  tag_in_dim]    f32
    tag_ids   : [N_tag]                 int  (DGL node IDs of the tag nodes)
    Returns {'video': [N_video, H], 'tag': [N_tag, H]}.
    """
    num_tags = params["tag_embed"].shape[0]
    # Clamp ids (out-of-range ids would otherwise gather arbitrary table rows).
    ids = jnp.clip(tag_ids.astype(jnp.int32), 0, num_tags - 1)
    # Coalesced XLA gather; the "+=" add itself is fused into the tag kernels.
    # TODO(synk): switch to an in-kernel bulk-table (v6e) / chunked bf16 (v7x)
    #   DMA gather when overlapping the gather with the video branch matters.
    emb_rows = jnp.take(params["tag_embed"], ids, axis=0)

    video = bn_linear_forward(
        video_feat,
        params["video_bn_gamma"], params["video_bn_beta"],
        params["video_w"], params["video_b"],
        tile_rows=tile_rows,
    )
    tag = bn_linear_forward(
        tag_feat,
        params["tag_bn_gamma"], params["tag_bn_beta"],
        params["tag_w"], params["tag_b"],
        add=emb_rows,
        tile_rows=tile_rows,
    )
    return {"video": video, "tag": tag}


# ---------------------------------------------------------------------------
# Params / reference
# ---------------------------------------------------------------------------
def init_params(key, num_tags, video_in_dim, tag_in_dim, hidden_dim):
    ks = jax.random.split(key, 7)
    scale_v = 1.0 / jnp.sqrt(video_in_dim)
    scale_t = 1.0 / jnp.sqrt(tag_in_dim)
    return {
        # video_fc: BatchNorm1d(video_in_dim) + Linear(video_in_dim, hidden_dim)
        "video_bn_gamma": jax.random.normal(ks[0], (1, video_in_dim), jnp.float32) * 0.1 + 1.0,
        "video_bn_beta":  jax.random.normal(ks[1], (1, video_in_dim), jnp.float32) * 0.1,
        "video_w": jax.random.uniform(ks[2], (video_in_dim, hidden_dim), jnp.float32,
                                      -scale_v, scale_v),
        "video_b": jax.random.uniform(ks[3], (1, hidden_dim), jnp.float32, -scale_v, scale_v),
        # tag_embed: Embedding(num_tags, tag_in_dim)
        "tag_embed": jax.random.normal(ks[4], (num_tags, tag_in_dim), jnp.float32),
        # tag_fc: BatchNorm1d(tag_in_dim) + Linear(tag_in_dim, hidden_dim)
        "tag_bn_gamma": jnp.ones((1, tag_in_dim), jnp.float32),
        "tag_bn_beta":  jnp.zeros((1, tag_in_dim), jnp.float32),
        "tag_w": jax.random.uniform(ks[5], (tag_in_dim, hidden_dim), jnp.float32,
                                    -scale_t, scale_t),
        "tag_b": jax.random.uniform(ks[6], (1, hidden_dim), jnp.float32, -scale_t, scale_t),
    }


def _reference(params, video_feat, tag_feat, tag_ids):
    """Pure-JAX reference (training-mode BatchNorm1d with batch stats)."""
    def bn(x, g, b):
        m = jnp.mean(x, axis=0, keepdims=True)
        v = jnp.mean((x - m) ** 2, axis=0, keepdims=True)
        return (x - m) / jnp.sqrt(v + BN_EPS) * g + b

    tag_x = tag_feat + params["tag_embed"][tag_ids]
    video = bn(video_feat, params["video_bn_gamma"], params["video_bn_beta"]) \
        @ params["video_w"] + params["video_b"]
    tag = bn(tag_x, params["tag_bn_gamma"], params["tag_bn_beta"]) \
        @ params["tag_w"] + params["tag_b"]
    return {"video": video, "tag": tag}


if __name__ == "__main__":
    # Module hyperparameters (feat_drop is unused in the PyTorch forward).
    num_tags, video_in_dim, tag_in_dim, hidden_dim = 64, 32, 16, 32
    n_video, n_tag = 16, 8

    key = jax.random.PRNGKey(0)
    k_par, k_v, k_t, k_id = jax.random.split(key, 4)

    params = init_params(k_par, num_tags, video_in_dim, tag_in_dim, hidden_dim)
    video_feat = jax.random.normal(k_v, (n_video, video_in_dim), jnp.float32)
    tag_feat = jax.random.normal(k_t, (n_tag, tag_in_dim), jnp.float32)
    tag_ids = jax.random.randint(k_id, (n_tag,), 0, num_tags, jnp.int32)

    out = common_embedding_forward(params, video_feat, tag_feat, tag_ids)
    out = jax.block_until_ready(out)

    ref = _reference(params, video_feat, tag_feat, tag_ids)
    assert out["video"].shape == (n_video, hidden_dim)
    assert out["tag"].shape == (n_tag, hidden_dim)
    assert jnp.allclose(out["video"], ref["video"], atol=1e-4, rtol=1e-4)
    assert jnp.allclose(out["tag"], ref["tag"], atol=1e-4, rtol=1e-4)

    print("KERNEL_OK")
</pallas_src>

<mosaic_0001>
module attributes {stable_mosaic.version = 11 : i64} {
  func.func @_bn_fold_stats_kernel(%arg0: i32, %arg1: memref<16x32xf32, #tpu.memory_space<vmem>>, %arg2: memref<1x32xf32, #tpu.memory_space<vmem>>, %arg3: memref<1x32xf32, #tpu.memory_space<vmem>>, %arg4: memref<32x32xf32, #tpu.memory_space<vmem>>, %arg5: memref<1x32xf32, #tpu.memory_space<vmem>>, %arg6: memref<1x32xf32, #tpu.memory_space<vmem>>, %arg7: memref<1x32xf32, #tpu.memory_space<vmem>>, %arg8: memref<1x32xf32, #tpu.memory_space<vmem>>, %arg9: memref<1x32xf32, #tpu.memory_space<vmem>>) attributes {dimension_semantics = [#tpu.dimension_semantics<arbitrary>], iteration_bounds = array<i64: 1>, scalar_prefetch = 0 : i64, scratch_operands = 2 : i64, tpu.core_type = #tpu.core_type<tc>, window_params = [{transform_indices = @transform_0, window_bounds = array<i64: 16, 32>}, {pipeline_mode = #tpu.pipeline_mode<synchronous>, transform_indices = @transform_1, window_bounds = array<i64: 1, 32>}, {pipeline_mode = #tpu.pipeline_mode<synchronous>, transform_indices = @transform_2, window_bounds = array<i64: 1, 32>}, {pipeline_mode = #tpu.pipeline_mode<synchronous>, transform_indices = @transform_3, window_bounds = array<i64: 32, 32>}, {pipeline_mode = #tpu.pipeline_mode<synchronous>, transform_indices = @transform_4, window_bounds = array<i64: 1, 32>}, {pipeline_mode = #tpu.pipeline_mode<synchronous>, transform_indices = @transform_5, window_bounds = array<i64: 1, 32>}, {pipeline_mode = #tpu.pipeline_mode<synchronous>, transform_indices = @transform_6, window_bounds = array<i64: 1, 32>}]} {
    %c0_i32 = arith.constant 0 : i32
    %0 = arith.cmpi eq, %arg0, %c0_i32 : i32
    %1 = arith.extui %0 : i1 to i32
    %c0_i32_0 = arith.constant 0 : i32
    %2 = arith.cmpi ne, %1, %c0_i32_0 : i32
    scf.if %2 {
      %cst_13 = arith.constant 0.000000e+00 : f32
      %18 = vector.broadcast %cst_13 : f32 to vector<1x32xf32>
      %c0_14 = arith.constant 0 : index
      %c0_15 = arith.constant 0 : index
      %19 = vector.load %arg8[%c0_14, %c0_15] : memref<1x32xf32, #tpu.memory_space<vmem>>, vector<1x32xf32>
      tpu.vector_store %arg8[%c0_14, %c0_15], %18 {strides = array<i32>} : memref<1x32xf32, #tpu.memory_space<vmem>>, vector<1x32xf32>,
      %cst_16 = arith.constant 0.000000e+00 : f32
      %20 = vector.broadcast %cst_16 : f32 to vector<1x32xf32>
      %c0_17 = arith.constant 0 : index
      %c0_18 = arith.constant 0 : index
      %21 = vector.load %arg9[%c0_17, %c0_18] : memref<1x32xf32, #tpu.memory_space<vmem>>, vector<1x32xf32>
      tpu.vector_store %arg9[%c0_17, %c0_18], %20 {strides = array<i32>} : memref<1x32xf32, #tpu.memory_space<vmem>>, vector<1x32xf32>,
    } else {
    }
    %c0 = arith.constant 0 : index
    %c0_1 = arith.constant 0 : index
    %3 = vector.load %arg1[%c0, %c0_1] : memref<16x32xf32, #tpu.memory_space<vmem>>, vector<16x32xf32>
    %c0_2 = arith.constant 0 : index
    %c0_3 = arith.constant 0 : index
    %4 = vector.load %arg8[%c0_2, %c0_3] : memref<1x32xf32, #tpu.memory_space<vmem>>, vector<1x32xf32>
    %cst = arith.constant dense<0.000000e+00> : vector<32xf32>
    %5 = vector.multi_reduction <add>, %3, %cst [0] : vector<16x32xf32> to vector<32xf32>
    %6 = vector.shape_cast %5 : vector<32xf32> to vector<1x32xf32>
    %7 = arith.addf %4, %6 : vector<1x32xf32>
    %c0_4 = arith.constant 0 : index
    %c0_5 = arith.constant 0 : index
    %8 = vector.load %arg8[%c0_4, %c0_5] : memref<1x32xf32, #tpu.memory_space<vmem>>, vector<1x32xf32>
    tpu.vector_store %arg8[%c0_4, %c0_5], %7 {strides = array<i32>} : memref<1x32xf32, #tpu.memory_space<vmem>>, vector<1x32xf32>,
    %c0_6 = arith.constant 0 : index
    %c0_7 = arith.constant 0 : index
    %9 = vector.load %arg9[%c0_6, %c0_7] : memref<1x32xf32, #tpu.memory_space<vmem>>, vector<1x32xf32>
    %10 = arith.mulf %3, %3 : vector<16x32xf32>
    %cst_8 = arith.constant dense<0.000000e+00> : vector<32xf32>
    %11 = vector.multi_reduction <add>, %10, %cst_8 [0] : vector<16x32xf32> to vector<32xf32>
    %12 = vector.shape_cast %11 : vector<32xf32> to vector<1x32xf32>
    %13 = arith.addf %9, %12 : vector<1x32xf32>
    %c0_9 = arith.constant 0 : index
    %c0_10 = arith.constant 0 : index
    %14 = vector.load %arg9[%c0_9, %c0_10] : memref<1x32xf32, #tpu.memory_space<vmem>>, vector<1x32xf32>
    tpu.vector_store %arg9[%c0_9, %c0_10], %13 {strides = array<i32>} : memref<1x32xf32, #tpu.memory_space<vmem>>, vector<1x32xf32>,
    %c0_i32_11 = arith.constant 0 : i32
    %15 = arith.cmpi eq, %arg0, %c0_i32_11 : i32
    %16 = arith.extui %15 : i1 to i32
    %c0_i32_12 = arith.constant 0 : i32
    %17 = arith.cmpi ne, %16, %c0_i32_12 : i32
    scf.if %17 {
      %c0_13 = arith.constant 0 : index
      %c0_14 = arith.constant 0 : index
      %18 = vector.load %arg8[%c0_13, %c0_14] : memref<1x32xf32, #tpu.memory_space<vmem>>, vector<1x32xf32>
      %cst_15 = arith.constant 6.250000e-02 : f32
      %19 = vector.broadcast %cst_15 : f32 to vector<1x32xf32>
      %20 = arith.mulf %18, %19 : vector<1x32xf32>
      %c0_16 = arith.constant 0 : index
      %c0_17 = arith.constant 0 : index
      %21 = vector.load %arg9[%c0_16, %c0_17] : memref<1x32xf32, #tpu.memory_space<vmem>>, vector<1x32xf32>
      %cst_18 = arith.constant 6.250000e-02 : f32
      %22 = vector.broadcast %cst_18 : f32 to vector<1x32xf32>
      %23 = arith.mulf %21, %22 : vector<1x32xf32>
      %24 = arith.mulf %20, %20 : vector<1x32xf32>
      %25 = arith.subf %23, %24 : vector<1x32xf32>
      %cst_19 = arith.constant 0.000000e+00 : f32
      %26 = vector.broadcast %cst_19 : f32 to vector<1x32xf32>
      %27 = arith.maximumf %25, %26 : vector<1x32xf32>
      %c0_20 = arith.constant 0 : index
      %c0_21 = arith.constant 0 : index
      %28 = vector.load %arg2[%c0_20, %c0_21] : memref<1x32xf32, #tpu.memory_space<vmem>>, vector<1x32xf32>
      %cst_22 = arith.constant 9.99999974E-6 : f32
      %29 = vector.broadcast %cst_22 : f32 to vector<1x32xf32>
      %30 = arith.addf %27, %29 : vector<1x32xf32>
      %31 = math.rsqrt %30 : vector<1x32xf32>
      %32 = arith.mulf %28, %31 : vector<1x32xf32>
      %c0_23 = arith.constant 0 : index
      %c0_24 = arith.constant 0 : index
      %33 = vector.load %arg6[%c0_23, %c0_24] : memref<1x32xf32, #tpu.memory_space<vmem>>, vector<1x32xf32>
      tpu.vector_store %arg6[%c0_23, %c0_24], %32 {strides = array<i32>} : memref<1x32xf32, #tpu.memory_space<vmem>>, vector<1x32xf32>,
      %c0_25 = arith.constant 0 : index
      %c0_26 = arith.constant 0 : index
      %34 = vector.load %arg3[%c0_25, %c0_26] : memref<1x32xf32, #tpu.memory_space<vmem>>, vector<1x32xf32>
      %35 = arith.mulf %20, %32 : vector<1x32xf32>
      %36 = arith.subf %34, %35 : vector<1x32xf32>
      %c0_27 = arith.constant 0 : index
      %c0_28 = arith.constant 0 : index
      %37 = vector.load %arg4[%c0_27, %c0_28] : memref<32x32xf32, #tpu.memory_space<vmem>>, vector<32x32xf32>
      %cst_29 = arith.constant dense<0.000000e+00> : vector<1x32xf32>
      %38 = tpu.matmul %36, %37, %cst_29 {dimension_numbers = #tpu.dot_dimension_numbers<[1], [0], [0], [1], [0, 0, 1, 1], [], []>} : vector<1x32xf32>, vector<32x32xf32>, vector<1x32xf32> -> vector<1x32xf32>
      %c0_30 = arith.constant 0 : index
      %c0_31 = arith.constant 0 : index
      %39 = vector.load %arg5[%c0_30, %c0_31] : memref<1x32xf32, #tpu.memory_space<vmem>>, vector<1x32xf32>
      %40 = arith.addf %38, %39 : vector<1x32xf32>
      %c0_32 = arith.constant 0 : index
      %c0_33 = arith.constant 0 : index
      %41 = vector.load %arg7[%c0_32, %c0_33] : memref<1x32xf32, #tpu.memory_space<vmem>>, vector<1x32xf32>
      tpu.vector_store %arg7[%c0_32, %c0_33], %40 {strides = array<i32>} : memref<1x32xf32, #tpu.memory_space<vmem>>, vector<1x32xf32>,
    } else {
    }
    return
  }
  func.func @transform_0(%arg0: i32) -> (i32, i32) {
    %c0_i32 = arith.constant 0 : i32
    %c0_i32_0 = arith.constant 0 : i32
    return %arg0, %c0_i32 : i32, i32
  }
  func.func @transform_1(%arg0: i32) -> (i32, i32) {
    %c0_i32 = arith.constant 0 : i32
    %c0_i32_0 = arith.constant 0 : i32
    %c0_i32_1 = arith.constant 0 : i32
    return %c0_i32, %c0_i32_0 : i32, i32
  }
  func.func @transform_2(%arg0: i32) -> (i32, i32) {
    %c0_i32 = arith.constant 0 : i32
    %c0_i32_0 = arith.constant 0 : i32
    %c0_i32_1 = arith.constant 0 : i32
    return %c0_i32, %c0_i32_0 : i32, i32
  }
  func.func @transform_3(%arg0: i32) -> (i32, i32) {
    %c0_i32 = arith.constant 0 : i32
    %c0_i32_0 = arith.constant 0 : i32
    %c0_i32_1 = arith.constant 0 : i32
    return %c0_i32, %c0_i32_0 : i32, i32
  }
  func.func @transform_4(%arg0: i32) -> (i32, i32) {
    %c0_i32 = arith.constant 0 : i32
    %c0_i32_0 = arith.constant 0 : i32
    %c0_i32_1 = arith.constant 0 : i32
    return %c0_i32, %c0_i32_0 : i32, i32
  }
  func.func @transform_5(%arg0: i32) -> (i32, i32) {
    %c0_i32 = arith.constant 0 : i32
    %c0_i32_0 = arith.constant 0 : i32
    %c0_i32_1 = arith.constant 0 : i32
    return %c0_i32, %c0_i32_0 : i32, i32
  }
  func.func @transform_6(%arg0: i32) -> (i32, i32) {
    %c0_i32 = arith.constant 0 : i32
    %c0_i32_0 = arith.constant 0 : i32
    %c0_i32_1 = arith.constant 0 : i32
    return %c0_i32, %c0_i32_0 : i32, i32
  }
}

</mosaic_0001>

<llo_original>
// kernel: tpu_custom_call.1
$region0: #{tpu_custom_call.1}
  #allocation0 [shape = 'u32[]', space=smem, size = 0x4, offset = 0x4, fixed_abs, tag = 'smem constant byte address 0x4 - core index']
  #allocation1 [shape = 'u32[144,128]{1,0:T(1,128)}', space=vmem, size = 0x12000, scoped, tag = 'internal scratch']
  #allocation2 [shape = 'f32[1,32]{1,0:T(1,128)}', space=vmem, size = 0x200, scoped, tag = 'scratch operand']
  #allocation3 [shape = 'f32[1,32]{1,0:T(1,128)}', space=vmem, size = 0x200, scoped, tag = 'scratch operand']
  %s0 = inlined_call_operand.hbm [shape: f32[16,32], index: 0, kind: input, shape index: {}]
  %s1 = inlined_call_operand.vmem [shape: f32[1,32], index: 1, kind: input, shape index: {}]
  %s2 = inlined_call_operand.vmem [shape: f32[1,32], index: 2, kind: input, shape index: {}]
  %s3 = inlined_call_operand.hbm [shape: f32[32,32], index: 3, kind: input, shape index: {}]
  %s4 = inlined_call_operand.vmem [shape: f32[1,32], index: 4, kind: input, shape index: {}]
  %s5 = inlined_call_operand.hbm [shape: f32[1,32], index: 5, kind: output, shape index: {0}]
  %s6 = inlined_call_operand.hbm [shape: f32[1,32], index: 6, kind: output, shape index: {1}]
  %7 = xla_tuple %s5, %s6
  %s8 = sld [smem:[#allocation0]]
  $region54: #{tpu_custom_call.1} parent=0
    _
  %s10 = ssub.s32 1, %s8
  %s11 = scalar_select 0, %s10, %s8
  $region1: #{tpu_custom_call.1} parent=0
    #allocation4 [shape = 'u8[8192]{0}', space=vmem, size = 0x2000, scoped, tag = 'input window, operand 0, single buffered']
    #allocation5 [shape = 's32[1]{0}', space=sflag, size = 0x4, scoped, tag = 'scoped memory for tpu_custom_call.1']
    #allocation6 [shape = 's32[1]{0}', space=sflag, size = 0x4, scoped, tag = 'scoped memory for tpu_custom_call.1']
    #allocation7 [shape = 'u8[16384]{0}', space=vmem, size = 0x4000, scoped, tag = 'input window, operand 3, single buffered']
    #allocation8 [shape = 's32[1]{0}', space=sflag, size = 0x4, scoped, tag = 'scoped memory for tpu_custom_call.1']
    #allocation9 [shape = 'u8[512]{0}', space=vmem, size = 0x400, scoped, tag = 'output window, operand 0, single buffered']
    #allocation10 [shape = 'u8[512]{0}', space=vmem, size = 0x400, scoped, tag = 'output window, operand 1, single buffered']
    #allocation11 [shape = 's32[1]{0}', space=sflag, size = 0x4, scoped, tag = 'scoped memory for tpu_custom_call.1']
    %12 = vsyncpa [#allocation5], 0
    %13 = vsyncpa [#allocation8], 0
    %14 = vsyncpa [#allocation6], 0
    %15 = vsyncpa [#allocation11], 0
    // Predicated region
    $region2: #{tpu_custom_call.1} parent=1 // pred_check
      _
    $region3: #{tpu_custom_call.1} parent=1 // pred_check_branch
      %17 = sbr.rel (0) target = $region5
    $region4: #{tpu_custom_call.1} parent=1 // pred_region
      %s19 = ssub.s32 256, 256
      %20 = vsyncadd [#allocation5], %s19
      %s21 = sshll.u32 [#allocation4], 4
      %s22 = int_to_ptr.vmem [resolvable:$true] %s21
      %27 = dma.hbm_to_vmem [thread:$0]  %s0, 256, %s22, [#allocation5], 128, 128, 8
    $region5: #{tpu_custom_call.1} parent=1 // pred_fallthru
      _
    // Predicated region
    $region6: #{tpu_custom_call.1} parent=1 // pred_check
      _
    $region7: #{tpu_custom_call.1} parent=1 // pred_check_branch
      %29 = sbr.rel (0) target = $region9
    $region8: #{tpu_custom_call.1} parent=1 // pred_region
      _
    $region9: #{tpu_custom_call.1} parent=1 // pred_fallthru
      _
    // Predicated region
    $region10: #{tpu_custom_call.1} parent=1 // pred_check
      _
    $region11: #{tpu_custom_call.1} parent=1 // pred_check_branch
      %31 = sbr.rel (0) target = $region13
    $region12: #{tpu_custom_call.1} parent=1 // pred_region
      _
    $region13: #{tpu_custom_call.1} parent=1 // pred_fallthru
      _
    // Predicated region
    $region14: #{tpu_custom_call.1} parent=1 // pred_check
      _
    $region15: #{tpu_custom_call.1} parent=1 // pred_check_branch
      %33 = sbr.rel (0) target = $region17
    $region16: #{tpu_custom_call.1} parent=1 // pred_region
      %s35 = ssub.s32 512, 512
      %36 = vsyncadd [#allocation8], %s35
      %s37 = sshll.u32 [#allocation7], 4
      %s38 = int_to_ptr.vmem [resolvable:$true] %s37
      %43 = dma.hbm_to_vmem [thread:$0]  %s3, 512, %s38, [#allocation8], 128, 128, 8
    $region17: #{tpu_custom_call.1} parent=1 // pred_fallthru
      _
    // Predicated region
    $region18: #{tpu_custom_call.1} parent=1 // pred_check
      _
    $region19: #{tpu_custom_call.1} parent=1 // pred_check_branch
      %45 = sbr.rel (0) target = $region21
    $region20: #{tpu_custom_call.1} parent=1 // pred_region
      _
    $region21: #{tpu_custom_call.1} parent=1 // pred_fallthru
      _
    // Predicated region
    $region22: #{tpu_custom_call.1} parent=1 // pred_check
      _
    $region23: #{tpu_custom_call.1} parent=1 // pred_check_branch
      %47 = sbr.rel (0) target = $region25
    $region24: #{tpu_custom_call.1} parent=1 // pred_region
      %48 = dma.done [#allocation5], 256
    $region25: #{tpu_custom_call.1} parent=1 // pred_fallthru
      _
    // Predicated region
    $region26: #{tpu_custom_call.1} parent=1 // pred_check
      _
    $region27: #{tpu_custom_call.1} parent=1 // pred_check_branch
      %50 = sbr.rel (0) target = $region29
    $region28: #{tpu_custom_call.1} parent=1 // pred_region
      %51 = dma.done [#allocation8], 512
    $region29: #{tpu_custom_call.1} parent=1 // pred_fallthru
      _
    %p52 = scmp.eq.s32.totalorder 0, 0
    // Predicated region
    $region30: #{tpu_custom_call.1} parent=1 // pred_check
      %p53 = pneg %p52
    $region31: #{tpu_custom_call.1} parent=1 // pred_check_branch
      %55 = sbr.rel (%p53) target = $region33
    $region32: #{tpu_custom_call.1} parent=1 // pred_region
      %vm56 = vcmask 253952
      %57 = vst.msk [vmem:[#allocation2] sm:$0x1] %vm56, 0.0
      %58 = vst.msk [vmem:[#allocation3] sm:$0x1] %vm56, 0.0
    $region33: #{tpu_custom_call.1} parent=1 // pred_fallthru
      _
    %v59 = vld [vmem:[#allocation4] sm:$0xff]
    %v60 = vld [vmem:[#allocation4 + $0x8] sm:$0xff]
    %v61 = vld [vmem:[#allocation2] sm:$0x1]
    %vm62 = vcmask 261120
    %v63 = vsel %vm62, %v59, 0.0
    %v64 = vsel %vm62, %v60, 0.0
    %v65 = vadd.f32 %v63, %v64
    %v66 = vrot.slane %v65, 4
    %v67 = vadd.f32 %v65, %v66
    %v68 = vrot.slane %v67, 2
    %v69 = vadd.f32 %v67, %v68
    %v70 = vrot.slane %v69, 1
    %v71 = vadd.f32 %v69, %v70
    %v72 = vadd.f32 %v61, %v71
    %vm73 = vcmask 253952
    %74 = vst.msk [vmem:[#allocation2] sm:$0x1] %vm73, %v72
    %v75 = vld [vmem:[#allocation3] sm:$0x1]
    %v76 = vmul.f32 %v59, %v59
    %v77 = vmul.f32 %v60, %v60
    %v78 = vsel %vm62, %v76, 0.0
    %v79 = vsel %vm62, %v77, 0.0
    %v80 = vadd.f32 %v78, %v79
    %v81 = vrot.slane %v80, 4
    %v82 = vadd.f32 %v80, %v81
    %v83 = vrot.slane %v82, 2
    %v84 = vadd.f32 %v82, %v83
    %v85 = vrot.slane %v84, 1
    %v86 = vadd.f32 %v84, %v85
    %v87 = vadd.f32 %v75, %v86
    %88 = vst.msk [vmem:[#allocation3] sm:$0x1] %vm73, %v87
    // Predicated region
    $region34: #{tpu_custom_call.1} parent=1 // pred_check
      %p89 = pneg %p52
    $region35: #{tpu_custom_call.1} parent=1 // pred_check_branch
      %91 = sbr.rel (%p89) target = $region37
    $region36: #{tpu_custom_call.1} parent=1 // pred_region
      %v92 = vld [vmem:[#allocation2] sm:$0x1]
      %v93 = vmul.f32 %v92, 0.0625
      %v94 = vld [vmem:[#allocation3] sm:$0x1]
      %v95 = vmul.f32 %v94, 0.0625
      %v96 = vmul.f32 %v93, %v93
      %v97 = vsub.f32 %v95, %v96
      %v98 = vmax.f32 %v97, 0.0
      %v99 = vld [vmem:[%s1] sm:$0x1]
      %v100 = vadd.f32 %v98, 1e-05
      %v101 = vrsqrt.pop %v100
      %v102 = vmul.f32 %v99, %v101
      %103 = vst.msk [vmem:[#allocation9] sm:$0x1] %vm73, %v102
      %v104 = vld [vmem:[%s2] sm:$0x1]
      %v105 = vmul.f32 %v93, %v102
      %v106 = vsub.f32 %v104, %v105
      %v107 = vld [vmem:[#allocation7] sm:$0xff]
      %v108 = vld [vmem:[#allocation7 + $0x8] sm:$0xff]
      %v109 = vld [vmem:[#allocation7 + $0x10] sm:$0xff]
      %v110 = vld [vmem:[#allocation7 + $0x18] sm:$0xff]
      %v111 = vld [vmem:[%s4] sm:$0x1]
      %v113 = vsel %vm62, %v106, 0
      %115 = vmatprep.subr.mxu0 0.0
      %116 = vmatpush1.msra.mxu0 0.0
      %117 = vmatprep.subr.mxu0 0.0
      %118 = vmatpush1.msra.mxu0 0.0
      %119 = vmatprep.subr.mxu0 0.0
      %120 = vmatpush1.msra.mxu0 0.0
      %121 = vmatprep.subr.mxu0 0.0
      %122 = vmatpush1.msra.mxu0 0.0
      %123 = vmatprep.subr.mxu0 0.0
      %124 = vmatpush1.msra.mxu0 0.0
      %125 = vmatprep.subr.mxu0 0.0
      %126 = vmatpush1.msra.mxu0 0.0
      %127 = vmatprep.subr.mxu0 0.0
      %128 = vmatpush1.msra.mxu0 0.0
      %129 = vmatprep.subr.mxu0 0.0
      %130 = vmatpush1.msra.mxu0 0.0
      %131 = vmatprep.subr.mxu0 0.0
      %132 = vmatpush1.msra.mxu0 0.0
      %133 = vmatprep.subr.mxu0 0.0
      %134 = vmatpush1.msra.mxu0 0.0
      %135 = vmatprep.subr.mxu0 0.0
      %136 = vmatpush1.msra.mxu0 0.0
      %137 = vmatprep.subr.mxu0 0.0
      %138 = vmatpush1.msra.mxu0 0.0
      %139 = vmatprep.subr.mxu0 0.0
      %140 = vmatpush1.msra.mxu0 %v110
      %141 = vmatprep.subr.mxu0 0.0
      %142 = vmatpush1.msra.mxu0 %v109
      %143 = vmatprep.subr.mxu0 0.0
      %144 = vmatpush1.msra.mxu0 %v108
      %145 = vmatprep.subr.mxu0 0.0
      %146 = vmatpush1.msra.mxu0 %v107
      %147 = vmatprep.subr.mxu0 0.0
      %148 = vmatpush2.msra.mxu0 0.0
      %149 = vmatprep.subr.mxu0 0.0
      %150 = vmatpush2.msra.mxu0 0.0
      %151 = vmatprep.subr.mxu0 0.0
      %152 = vmatpush2.msra.mxu0 0.0
      %153 = vmatprep.subr.mxu0 0.0
      %154 = vmatpush2.msra.mxu0 0.0
      %155 = vmatprep.subr.mxu0 0.0
      %156 = vmatpush2.msra.mxu0 0.0
      %157 = vmatprep.subr.mxu0 0.0
      %158 = vmatpush2.msra.mxu0 0.0
      %159 = vmatprep.subr.mxu0 0.0
      %160 = vmatpush2.msra.mxu0 0.0
      %161 = vmatprep.subr.mxu0 0.0
      %162 = vmatpush2.msra.mxu0 0.0
      %163 = vmatprep.subr.mxu0 0.0
      %164 = vmatpush2.msra.mxu0 0.0
      %165 = vmatprep.subr.mxu0 0.0
      %166 = vmatpush2.msra.mxu0 0.0
      %167 = vmatprep.subr.mxu0 0.0
      %168 = vmatpush2.msra.mxu0 0.0
      %169 = vmatprep.subr.mxu0 0.0
      %170 = vmatpush2.msra.mxu0 0.0
      %171 = vmatprep.subr.mxu0 0.0
      %172 = vmatpush2.msra.mxu0 0.0
      %173 = vmatprep.subr.mxu0 0.0
      %174 = vmatpush2.msra.mxu0 0.0
      %175 = vmatprep.subr.mxu0 0.0
      %176 = vmatpush2.msra.mxu0 0.0
      %177 = vmatprep.subr.mxu0 0.0
      %178 = vmatpush2.msra.mxu0 0.0
      %179 = vmatprep.mubr.f32.mxu0 0.0
      %180 = vmatmul.mubr.f32.gmra.mxu0 %v113
      %v181 = vpop.f32.mrf.mxu0
      %v182 = vadd.f32 %v111, %v181
      %v183 = vpop.f32.mrf.mxu0
      %184 = vdwg.mxu0
      %185 = vst.msk [vmem:[#allocation10] sm:$0x1] %vm73, %v182
    $region37: #{tpu_custom_call.1} parent=1 // pred_fallthru
      _
    // Predicated region
    $region38: #{tpu_custom_call.1} parent=1 // pred_check
      _
    $region39: #{tpu_custom_call.1} parent=1 // pred_check_branch
      %187 = sbr.rel (0) target = $region41
    $region40: #{tpu_custom_call.1} parent=1 // pred_region
      %s189 = ssub.s32 16, 16
      %190 = vsyncadd [#allocation6], %s189
      %s192 = sshll.u32 [#allocation9], 4
      %s193 = int_to_ptr.vmem [resolvable:$true] %s192
      %195 = dma.vmem_to_hbm [thread:$0]  %s193, 16, %s5, [#allocation6]
    $region41: #{tpu_custom_call.1} parent=1 // pred_fallthru
      _
    // Predicated region
    $region42: #{tpu_custom_call.1} parent=1 // pred_check
      _
    $region43: #{tpu_custom_call.1} parent=1 // pred_check_branch
      %197 = sbr.rel (0) target = $region45
    $region44: #{tpu_custom_call.1} parent=1 // pred_region
      %s199 = ssub.s32 16, 16
      %200 = vsyncadd [#allocation11], %s199
      %s202 = sshll.u32 [#allocation10], 4
      %s203 = int_to_ptr.vmem [resolvable:$true] %s202
      %205 = dma.vmem_to_hbm [thread:$0]  %s203, 16, %s6, [#allocation11]
    $region45: #{tpu_custom_call.1} parent=1 // pred_fallthru
      _
    // Predicated region
    $region46: #{tpu_custom_call.1} parent=1 // pred_check
      _
    $region47: #{tpu_custom_call.1} parent=1 // pred_check_branch
      %207 = sbr.rel (0) target = $region49
    $region48: #{tpu_custom_call.1} parent=1 // pred_region
      %208 = dma.done [#allocation6], 16
    $region49: #{tpu_custom_call.1} parent=1 // pred_fallthru
      _
    // Predicated region
    $region50: #{tpu_custom_call.1} parent=1 // pred_check
      _
    $region51: #{tpu_custom_call.1} parent=1 // pred_check_branch
      %210 = sbr.rel (0) target = $region53
    $region52: #{tpu_custom_call.1} parent=1 // pred_region
      %211 = dma.done [#allocation11], 16
    $region53: #{tpu_custom_call.1} parent=1 // pred_fallthru
      _
    %212 = vsyncpa [#allocation5], 1
    %213 = vsyncpa [#allocation8], 1
    %214 = vsyncpa [#allocation6], 1
    %215 = vsyncpa [#allocation11], 1

</llo_original>
